<compile_context>
chip_gen: v5e
topology: v5e:2x2
jax: 0.10.0
libtpu: 0.0.40
codegen_flags: <defaults>
</compile_context>

<pallas_src>
import functools

import jax
import jax.numpy as jnp
from jax import lax
from jax.experimental import pallas as pl
from jax.experimental.pallas import tpu as pltpu


def _shape_gain_kernel(flat_ref, shape_t_ref, shape_ref, gain_ref, out_ref, *,
                       eps, log_gain):
    f = flat_ref[...].astype(jnp.float32)     # (tn, D) upcast in-kernel
    sh_t = shape_t_ref[...]                   # (D, S)  pre-transposed codebook
    sh = shape_ref[...]                       # (S, D)  codebook (one-hot gather)
    g = gain_ref[...]                         # (1, G)

    tn = f.shape[0]
    S = sh.shape[0]
    G = g.shape[1]

    # ---- shape codeword selection (max inner product) ----
    dist = jnp.dot(f, sh_t, preferred_element_type=jnp.float32)       # (tn, S)
    row_max = jnp.max(dist, axis=-1, keepdims=True)                   # (tn, 1)
    s_iota = lax.broadcasted_iota(jnp.int32, (tn, S), 1)
    # first index achieving the max (matches torch argmax tie-breaking)
    shape_ind = jnp.min(jnp.where(dist == row_max, s_iota, S),
                        axis=-1, keepdims=True)                       # (tn, 1)
    shape_onehot = (s_iota == shape_ind).astype(jnp.float32)          # (tn, S)
    shape_q = jnp.dot(shape_onehot, sh,
                      preferred_element_type=jnp.float32)             # (tn, D)

    # ---- gain (elementwise, exactly as the reference computes it) ----
    gain_flat = jnp.sum(f * shape_q, axis=-1, keepdims=True)          # (tn, 1)
    if log_gain:
        gain_flat = jnp.log(jnp.maximum(gain_flat, eps))

    # ---- gain codeword selection ----
    # argmax_g -(gf^2 - 2*gf*g + g^2) == argmax_g g*(2*gf - g)
    score = g * (2.0 * gain_flat - g)                                 # (tn, G)
    g_iota = lax.broadcasted_iota(jnp.int32, (tn, G), 1)
    g_max = jnp.max(score, axis=-1, keepdims=True)
    gain_ind = jnp.min(jnp.where(score == g_max, g_iota, G),
                       axis=-1, keepdims=True)                        # (tn, 1)
    gain_onehot = (g_iota == gain_ind).astype(jnp.float32)            # (tn, G)
    gain_q = jnp.sum(gain_onehot * g, axis=-1, keepdims=True)         # (tn, 1)
    if log_gain:
        gain_q = jnp.exp(gain_q)

    out_ref[...] = (gain_q * shape_q).astype(out_ref.dtype)


def _round_up(a, b):
    return (a + b - 1) // b * b


def _cdiv(a, b):
    return -(-a // b)


def shape_gain_quantize(x, shape_codebook, gain_codebook, *, eps=1e-5,
                        log_gain=True, row_tile=None,
                        vmem_cap_bytes=8 << 20, out_dtype=jnp.float32):
    """Pallas implementation of ShapeGainCodebook.forward (eval mode).

    x              : (..., D)  f32 or bf16 (upcast happens inside the kernel)
    shape_codebook : (S, D)
    gain_codebook  : (G,)
    returns (quantize, (0, 0)) with quantize shaped (..., D), `out_dtype`.
    """
    x_shape = x.shape
    D = x_shape[-1]
    S = shape_codebook.shape[0]
    G = gain_codebook.shape[0]

    flat = jnp.reshape(x, (-1, D))          # native dtype; no wrapper astype/pad
    N = flat.shape[0]

    in_bytes = jnp.dtype(flat.dtype).itemsize
    out_bytes = jnp.dtype(out_dtype).itemsize

    # Row tile: ~1 MiB of streamed input per step (overhead-amortizing),
    # multiple of 8 sublanes.
    if row_tile is None:
        row_tile = max(8, (1 << 20) // (D * in_bytes))
    tn = max(8, _round_up(row_tile, 8))
    # Keep double-buffered (in + out) tiles well under the scoped VMEM limit
    # (v7x has only 64 MiB VMEM / 32 MiB default scoped).
    per_row_vmem = 2 * D * (in_bytes + out_bytes)     # 2 bufs x (in + out)
    tn = min(tn, max(8, (vmem_cap_bytes // per_row_vmem) // 8 * 8))
    # Keep >= 2 grid steps so the "parallel" axis can shard across v7x's 2 TCs.
    tn = min(tn, max(8, _round_up(_cdiv(N, 2), 8)))

    grid = _cdiv(N, tn)                     # ragged last block handled by Pallas

    shape_cb = shape_codebook.astype(jnp.float32)        # (S, D)
    shape_cb_t = shape_cb.T                              # (D, S), transposed once
    gain_row = jnp.reshape(gain_codebook.astype(jnp.float32), (1, G))

    kernel = functools.partial(_shape_gain_kernel, eps=eps, log_gain=log_gain)

    quant_flat = pl.pallas_call(
        kernel,
        out_shape=jax.ShapeDtypeStruct((N, D), out_dtype),
        grid_spec=pltpu.PrefetchScalarGridSpec(
            num_scalar_prefetch=0,
            grid=(grid,),
            in_specs=[
                pl.BlockSpec((tn, D), lambda i: (i, 0)),   # flattened inputs
                pl.BlockSpec((D, S), lambda i: (0, 0)),    # shape codebook^T
                pl.BlockSpec((S, D), lambda i: (0, 0)),    # shape codebook
                pl.BlockSpec((1, G), lambda i: (0, 0)),    # gain codebook
            ],
            out_specs=pl.BlockSpec((tn, D), lambda i: (i, 0)),
        ),
        compiler_params=pltpu.CompilerParams(
            dimension_semantics=("parallel",)),
    )(flat, shape_cb_t, shape_cb, gain_row)

    quantize = jnp.reshape(quant_flat, x_shape[:-1] + (D,))
    # not training -> no EMA update / code expiry
    # TODO(synk): training-path (EMA update, kmeans init, code expiry, dist
    # all-reduce) is stateful/host-driven and not implemented here.
    return quantize, (0, 0)


def _reference(x, shape_codebook, gain_codebook, eps=1e-5, log_gain=True):
    """Pure-JAX reference mirroring the PyTorch forward (eval mode)."""
    x_shape = x.shape
    flat = jnp.reshape(x, (-1, x_shape[-1])).astype(jnp.float32)
    dist = flat @ shape_codebook.T
    shape_ind = jnp.argmax(dist, axis=-1)
    shape_q = shape_codebook[shape_ind]
    gain_flat = jnp.sum(flat * shape_q, axis=1, keepdims=True)
    if log_gain:
        gain_flat = jnp.log(jnp.maximum(gain_flat, eps))
    g = gain_codebook[None, :]
    gdist = -(gain_flat ** 2 - 2.0 * gain_flat @ g + g ** 2)
    gain_ind = jnp.argmax(gdist, axis=-1)
    gain_q = gain_codebook[gain_ind]
    if log_gain:
        gain_q = jnp.exp(gain_q)
    quant = gain_q[:, None] * shape_q
    return jnp.reshape(quant, x_shape[:-1] + (x_shape[-1],))


if __name__ == "__main__":
    # Small, deterministic setup consistent with the module's __init__:
    #   dim = 32, shape_codebook_size = 64, gain_codebook_size = 16
    key = jax.random.PRNGKey(0)
    k_x, k_x2, k_x3, k_shape, k_gain = jax.random.split(key, 5)

    dim = 32
    shape_codebook_size = 64
    gain_codebook_size = 16

    # buffers: shape ~ randn(S, D); gain ~ rand(G)*0.9 + 1.0
    shape_cb = jax.random.normal(k_shape, (shape_codebook_size, dim), jnp.float32)
    gain_cb = jax.random.uniform(k_gain, (gain_codebook_size,), jnp.float32) * 0.9 + 1.0

    # 1) input x: (batch=2, seq=8, dim=32) -> N = 16 rows, 2 grid steps
    x = jax.random.normal(k_x, (2, 8, dim), jnp.float32)
    quantize, num_replace = shape_gain_quantize(x, shape_cb, gain_cb)
    quantize = jax.block_until_ready(quantize)
    ref = _reference(x, shape_cb, gain_cb)
    assert quantize.shape == x.shape
    assert jnp.allclose(quantize, ref, atol=1e-5, rtol=1e-5), "mismatch vs reference"
    assert num_replace == (0, 0)

    # 2) N not a multiple of the tile -> ragged last block, multi-step grid
    x2 = jax.random.normal(k_x2, (3, 40, dim), jnp.float32)   # N = 120
    q2, nr2 = shape_gain_quantize(x2, shape_cb, gain_cb, row_tile=16)  # grid = 8
    q2 = jax.block_until_ready(q2)
    ref2 = _reference(x2, shape_cb, gain_cb)
    assert q2.shape == x2.shape
    assert jnp.allclose(q2, ref2, atol=1e-5, rtol=1e-5), "mismatch vs reference (ragged)"
    assert nr2 == (0, 0)

    # 3) bf16 input streamed natively (upcast in-kernel), default (large) tile
    x3 = jax.random.normal(k_x3, (4, 500, dim), jnp.float32).astype(jnp.bfloat16)
    q3, nr3 = shape_gain_quantize(x3, shape_cb, gain_cb)      # N = 2000
    q3 = jax.block_until_ready(q3)
    ref3 = _reference(x3, shape_cb, gain_cb)
    assert q3.shape == x3.shape
    assert jnp.allclose(q3, ref3, atol=1e-5, rtol=1e-5), "mismatch vs reference (bf16)"
    assert nr3 == (0, 0)

    print("KERNEL_OK")
</pallas_src>

<mosaic_0001>
module attributes {stable_mosaic.version = 11 : i64} {
  func.func @_shape_gain_kernel(%arg0: i32, %arg1: memref<8x32xf32, #tpu.memory_space<vmem>>, %arg2: memref<32x64xf32, #tpu.memory_space<vmem>>, %arg3: memref<64x32xf32, #tpu.memory_space<vmem>>, %arg4: memref<1x16xf32, #tpu.memory_space<vmem>>, %arg5: memref<8x32xf32, #tpu.memory_space<vmem>>) attributes {dimension_semantics = [#tpu.dimension_semantics<parallel>], iteration_bounds = array<i64: 2>, scalar_prefetch = 0 : i64, scratch_operands = 0 : i64, tpu.core_type = #tpu.core_type<tc>, window_params = [{transform_indices = @transform_0, window_bounds = array<i64: 8, 32>}, {pipeline_mode = #tpu.pipeline_mode<synchronous>, transform_indices = @transform_1, window_bounds = array<i64: 32, 64>}, {pipeline_mode = #tpu.pipeline_mode<synchronous>, transform_indices = @transform_2, window_bounds = array<i64: 64, 32>}, {pipeline_mode = #tpu.pipeline_mode<synchronous>, transform_indices = @transform_3, window_bounds = array<i64: 1, 16>}, {transform_indices = @transform_4, window_bounds = array<i64: 8, 32>}]} {
    %c0 = arith.constant 0 : index
    %c0_0 = arith.constant 0 : index
    %0 = vector.load %arg1[%c0, %c0_0] : memref<8x32xf32, #tpu.memory_space<vmem>>, vector<8x32xf32>
    %c0_1 = arith.constant 0 : index
    %c0_2 = arith.constant 0 : index
    %1 = vector.load %arg2[%c0_1, %c0_2] : memref<32x64xf32, #tpu.memory_space<vmem>>, vector<32x64xf32>
    %c0_3 = arith.constant 0 : index
    %c0_4 = arith.constant 0 : index
    %2 = vector.load %arg3[%c0_3, %c0_4] : memref<64x32xf32, #tpu.memory_space<vmem>>, vector<64x32xf32>
    %c0_5 = arith.constant 0 : index
    %c0_6 = arith.constant 0 : index
    %3 = vector.load %arg4[%c0_5, %c0_6] : memref<1x16xf32, #tpu.memory_space<vmem>>, vector<1x16xf32>
    %cst = arith.constant dense<0.000000e+00> : vector<8x64xf32>
    %4 = tpu.matmul %0, %1, %cst {dimension_numbers = #tpu.dot_dimension_numbers<[1], [0], [0], [1], [0, 0, 1, 1], [], []>} : vector<8x32xf32>, vector<32x64xf32>, vector<8x64xf32> -> vector<8x64xf32>
    %cst_7 = arith.constant dense<0xFF800000> : vector<8xf32>
    %5 = vector.multi_reduction <maximumf>, %4, %cst_7 [1] : vector<8x64xf32> to vector<8xf32>
    %6 = vector.shape_cast %5 : vector<8xf32> to vector<8x1xf32>
    %7 = tpu.iota {dimensions = array<i32: 1>} : vector<8x64xi32>
    %8 = vector.broadcast %6 : vector<8x1xf32> to vector<8x64xf32>
    %9 = arith.cmpf oeq, %4, %8 : vector<8x64xf32>
    %c64_i32 = arith.constant 64 : i32
    %10 = vector.broadcast %c64_i32 : i32 to vector<8x64xi32>
    %11 = arith.select %9, %7, %10 : vector<8x64xi1>, vector<8x64xi32>
    %cst_8 = arith.constant dense<2147483647> : vector<8xi32>
    %12 = vector.multi_reduction <minsi>, %11, %cst_8 [1] : vector<8x64xi32> to vector<8xi32>
    %13 = vector.shape_cast %12 : vector<8xi32> to vector<8x1xi32>
    %14 = vector.broadcast %13 : vector<8x1xi32> to vector<8x64xi32>
    %15 = arith.cmpi eq, %7, %14 : vector<8x64xi32>
    %16 = arith.extui %15 : vector<8x64xi1> to vector<8x64xi32>
    %17 = arith.sitofp %16 : vector<8x64xi32> to vector<8x64xf32>
    %cst_9 = arith.constant dense<0.000000e+00> : vector<8x32xf32>
    %18 = tpu.matmul %17, %2, %cst_9 {dimension_numbers = #tpu.dot_dimension_numbers<[1], [0], [0], [1], [0, 0, 1, 1], [], []>} : vector<8x64xf32>, vector<64x32xf32>, vector<8x32xf32> -> vector<8x32xf32>
    %19 = arith.mulf %0, %18 : vector<8x32xf32>
    %cst_10 = arith.constant dense<0.000000e+00> : vector<8xf32>
    %20 = vector.multi_reduction <add>, %19, %cst_10 [1] : vector<8x32xf32> to vector<8xf32>
    %21 = vector.shape_cast %20 : vector<8xf32> to vector<8x1xf32>
    %cst_11 = arith.constant 9.99999974E-6 : f32
    %22 = vector.broadcast %cst_11 : f32 to vector<8x1xf32>
    %23 = arith.maximumf %21, %22 : vector<8x1xf32>
    %24 = math.log %23 : vector<8x1xf32>
    %cst_12 = arith.constant 2.000000e+00 : f32
    %25 = vector.broadcast %cst_12 : f32 to vector<8x1xf32>
    %26 = arith.mulf %25, %24 : vector<8x1xf32>
    %27 = vector.broadcast %26 : vector<8x1xf32> to vector<8x16xf32>
    %28 = vector.broadcast %3 : vector<1x16xf32> to vector<8x16xf32>
    %29 = arith.subf %27, %28 : vector<8x16xf32>
    %30 = vector.broadcast %3 : vector<1x16xf32> to vector<8x16xf32>
    %31 = arith.mulf %30, %29 : vector<8x16xf32>
    %32 = tpu.iota {dimensions = array<i32: 1>} : vector<8x16xi32>
    %cst_13 = arith.constant dense<0xFF800000> : vector<8xf32>
    %33 = vector.multi_reduction <maximumf>, %31, %cst_13 [1] : vector<8x16xf32> to vector<8xf32>
    %34 = vector.shape_cast %33 : vector<8xf32> to vector<8x1xf32>
    %35 = vector.broadcast %34 : vector<8x1xf32> to vector<8x16xf32>
    %36 = arith.cmpf oeq, %31, %35 : vector<8x16xf32>
    %c16_i32 = arith.constant 16 : i32
    %37 = vector.broadcast %c16_i32 : i32 to vector<8x16xi32>
    %38 = arith.select %36, %32, %37 : vector<8x16xi1>, vector<8x16xi32>
    %cst_14 = arith.constant dense<2147483647> : vector<8xi32>
    %39 = vector.multi_reduction <minsi>, %38, %cst_14 [1] : vector<8x16xi32> to vector<8xi32>
    %40 = vector.shape_cast %39 : vector<8xi32> to vector<8x1xi32>
    %41 = vector.broadcast %40 : vector<8x1xi32> to vector<8x16xi32>
    %42 = arith.cmpi eq, %32, %41 : vector<8x16xi32>
    %43 = arith.extui %42 : vector<8x16xi1> to vector<8x16xi32>
    %44 = arith.sitofp %43 : vector<8x16xi32> to vector<8x16xf32>
    %45 = vector.broadcast %3 : vector<1x16xf32> to vector<8x16xf32>
    %46 = arith.mulf %44, %45 : vector<8x16xf32>
    %cst_15 = arith.constant dense<0.000000e+00> : vector<8xf32>
    %47 = vector.multi_reduction <add>, %46, %cst_15 [1] : vector<8x16xf32> to vector<8xf32>
    %48 = vector.shape_cast %47 : vector<8xf32> to vector<8x1xf32>
    %49 = math.exp %48 : vector<8x1xf32>
    %50 = vector.broadcast %49 : vector<8x1xf32> to vector<8x32xf32>
    %51 = arith.mulf %50, %18 : vector<8x32xf32>
    %c0_16 = arith.constant 0 : index
    %c0_17 = arith.constant 0 : index
    %52 = vector.load %arg5[%c0_16, %c0_17] : memref<8x32xf32, #tpu.memory_space<vmem>>, vector<8x32xf32>
    tpu.vector_store %arg5[%c0_16, %c0_17], %51 {strides = array<i32>} : memref<8x32xf32, #tpu.memory_space<vmem>>, vector<8x32xf32>,
    return
  }
  func.func @transform_0(%arg0: i32) -> (i32, i32) {
    %c0_i32 = arith.constant 0 : i32
    %c0_i32_0 = arith.constant 0 : i32
    return %arg0, %c0_i32 : i32, i32
  }
  func.func @transform_1(%arg0: i32) -> (i32, i32) {
    %c0_i32 = arith.constant 0 : i32
    %c0_i32_0 = arith.constant 0 : i32
    %c0_i32_1 = arith.constant 0 : i32
    return %c0_i32, %c0_i32_0 : i32, i32
  }
  func.func @transform_2(%arg0: i32) -> (i32, i32) {
    %c0_i32 = arith.constant 0 : i32
    %c0_i32_0 = arith.constant 0 : i32
    %c0_i32_1 = arith.constant 0 : i32
    return %c0_i32, %c0_i32_0 : i32, i32
  }
  func.func @transform_3(%arg0: i32) -> (i32, i32) {
    %c0_i32 = arith.constant 0 : i32
    %c0_i32_0 = arith.constant 0 : i32
    %c0_i32_1 = arith.constant 0 : i32
    return %c0_i32, %c0_i32_0 : i32, i32
  }
  func.func @transform_4(%arg0: i32) -> (i32, i32) {
    %c0_i32 = arith.constant 0 : i32
    %c0_i32_0 = arith.constant 0 : i32
    return %arg0, %c0_i32 : i32, i32
  }
}

</mosaic_0001>

<llo_original>
// kernel: tpu_custom_call.1
$region0: #{tpu_custom_call.1}
  #allocation0 [shape = 'u32[]', space=smem, size = 0x4, offset = 0x4, fixed_abs, tag = 'smem constant byte address 0x4 - core index']
  #allocation1 [shape = 'u32[72,128]{1,0:T(1,128)}', space=vmem, size = 0x9000, scoped, tag = 'internal scratch']
  %s0 = inlined_call_operand.vmem [shape: f32[16,32], index: 0, kind: input, shape index: {}]
  %s1 = inlined_call_operand.vmem [shape: f32[32,64], index: 1, kind: input, shape index: {}]
  %s2 = inlined_call_operand.vmem [shape: f32[64,32], index: 2, kind: input, shape index: {}]
  %s3 = inlined_call_operand.vmem [shape: f32[1,16], index: 3, kind: input, shape index: {}]
  %s4 = inlined_call_operand.hbm [shape: f32[16,32], index: 4, kind: output, shape index: {}]
  %s5 = sld [smem:[#allocation0]]
  $region49: #{tpu_custom_call.1} parent=0
    _
  %s7 = ssub.s32 1, %s5
  %s8 = scalar_select 0, %s7, %s5
  $region1: #{tpu_custom_call.1} parent=0
    #allocation2 [shape = 'u8[8192]{0}', space=vmem, size = 0x2000, scoped, tag = 'output window, operand 0']
    #allocation3 [shape = 's32[2]{0}', space=sflag, size = 0x8, scoped, tag = 'scoped memory for tpu_custom_call.1']
    %9 = vsyncpa [#allocation3], 0
    %s10 = scalar_lea.sflag [#allocation3], 1
    %11 = vsyncpa %s10, 0
    loop: start=0, step=1, limit=4
    $region2: #{tpu_custom_call.1} parent=1 // loop_pre_header
      _
    $region3: #{tpu_custom_call.1} parent=1 // loop_header
      %s13 = sphi 0, %s17
      %p14 = scmp.ge.s32.totalorder %s13, 4
      %s23 = sphi 0, %s25
      %s26 = sphi 0, %s23
      %s27 = sphi 0, %s26
      %s43 = sphi 0, %s27
      %s47 = sphi 0, %s47
      %s49 = sphi 0, %s47
      %s50 = sphi 0, %s49
      %s64 = sphi 0, %s50
      %s68 = sphi 0, %s68
      %s70 = sphi 0, %s68
      %s71 = sphi 0, %s70
      %s85 = sphi 0, %s71
      %s89 = sphi 0, %s89
      %s91 = sphi 0, %s89
      %s92 = sphi 0, %s91
      %s106 = sphi 0, %s92
      %s112 = sphi 0, %s114
      %s115 = sphi 0, %s112
      %s116 = sphi 0, %s115
      %s132 = sphi 0, %s116
    $region4: #{tpu_custom_call.1} parent=1 // loop_header_branch
      %16 = sbr.rel (%p14) target = $region8
    $region5: #{tpu_custom_call.1} parent=1 // loop_body
      %s18 = ssub.s32 %s13, 1
      %s19 = ssub.s32 %s13, 2
      %s20 = sadd.s32 %s13, 1
      %s21 = ssub.s32 %s13, %s20
      %p22 = scmp.eq.s32.totalorder %s21, 0
      %s24 = sadd.s32 %s23, 1
      %s25 = scalar_select %p22, %s23, %s24
      %p28 = pneg %p22
      %p29 = scmp.eq.s32.totalorder %s13, 1
      %p30 = por %p28, %p29
      %p31 = scmp.ne.s32.totalorder %s23, %s26
      %p32 = scmp.eq.s32.totalorder %s13, 0
      %p33 = por %p31, %p32
      %p34 = scmp.ne.s32.totalorder %s23, %s26
      %p35 = scmp.eq.s32.totalorder %s18, 1
      %p36 = por %p34, %p35
      %p37 = scmp.ne.s32.totalorder %s26, %s27
      %p38 = scmp.eq.s32.totalorder %s18, 0
      %p39 = por %p37, %p38
      %p40 = scmp.ne.s32.totalorder %s26, %s27
      %p41 = scmp.eq.s32.totalorder %s19, 1
      %p42 = por %p40, %p41
      %p44 = scmp.ne.s32.totalorder %s27, %s43
      %p45 = scmp.eq.s32.totalorder %s19, 0
      %p46 = por %p44, %p45
      %s48 = sadd.s32 %s47, 1
      %p51 = scmp.eq.s32.totalorder %s13, 1
      %p52 = scmp.ne.s32.totalorder %s47, %s49
      %p53 = scmp.eq.s32.totalorder %s13, 0
      %p54 = por %p52, %p53
      %p55 = scmp.ne.s32.totalorder %s47, %s49
      %p56 = scmp.eq.s32.totalorder %s18, 1
      %p57 = por %p55, %p56
      %p58 = scmp.ne.s32.totalorder %s49, %s50
      %p59 = scmp.eq.s32.totalorder %s18, 0
      %p60 = por %p58, %p59
      %p61 = scmp.ne.s32.totalorder %s49, %s50
      %p62 = scmp.eq.s32.totalorder %s19, 1
      %p63 = por %p61, %p62
      %p65 = scmp.ne.s32.totalorder %s50, %s64
      %p66 = scmp.eq.s32.totalorder %s19, 0
      %p67 = por %p65, %p66
      %s69 = sadd.s32 %s68, 1
      %p72 = scmp.eq.s32.totalorder %s13, 1
      %p73 = scmp.ne.s32.totalorder %s68, %s70
      %p74 = scmp.eq.s32.totalorder %s13, 0
      %p75 = por %p73, %p74
      %p76 = scmp.ne.s32.totalorder %s68, %s70
      %p77 = scmp.eq.s32.totalorder %s18, 1
      %p78 = por %p76, %p77
      %p79 = scmp.ne.s32.totalorder %s70, %s71
      %p80 = scmp.eq.s32.totalorder %s18, 0
      %p81 = por %p79, %p80
      %p82 = scmp.ne.s32.totalorder %s70, %s71
      %p83 = scmp.eq.s32.totalorder %s19, 1
      %p84 = por %p82, %p83
      %p86 = scmp.ne.s32.totalorder %s71, %s85
      %p87 = scmp.eq.s32.totalorder %s19, 0
      %p88 = por %p86, %p87
      %s90 = sadd.s32 %s89, 1
      %p93 = scmp.eq.s32.totalorder %s13, 1
      %p94 = scmp.ne.s32.totalorder %s89, %s91
      %p95 = scmp.eq.s32.totalorder %s13, 0
      %p96 = por %p94, %p95
      %p97 = scmp.ne.s32.totalorder %s89, %s91
      %p98 = scmp.eq.s32.totalorder %s18, 1
      %p99 = por %p97, %p98
      %p100 = scmp.ne.s32.totalorder %s91, %s92
      %p101 = scmp.eq.s32.totalorder %s18, 0
      %p102 = por %p100, %p101
      %p103 = scmp.ne.s32.totalorder %s91, %s92
      %p104 = scmp.eq.s32.totalorder %s19, 1
      %p105 = por %p103, %p104
      %p107 = scmp.ne.s32.totalorder %s92, %s106
      %p108 = scmp.eq.s32.totalorder %s19, 0
      %p109 = por %p107, %p108
      %s110 = ssub.s32 %s13, %s20
      %p111 = scmp.eq.s32.totalorder %s110, 0
      %s113 = sadd.s32 %s112, 1
      %s114 = scalar_select %p111, %s112, %s113
      %p117 = pneg %p111
      %p118 = scmp.eq.s32.totalorder %s13, 1
      %p119 = por %p117, %p118
      %p120 = scmp.ne.s32.totalorder %s112, %s115
      %p121 = scmp.eq.s32.totalorder %s13, 0
      %p122 = por %p120, %p121
      %p123 = scmp.ne.s32.totalorder %s112, %s115
      %p124 = scmp.eq.s32.totalorder %s18, 1
      %p125 = por %p123, %p124
      %p126 = scmp.ne.s32.totalorder %s115, %s116
      %p127 = scmp.eq.s32.totalorder %s18, 0
      %p128 = por %p126, %p127
      %p129 = scmp.ne.s32.totalorder %s115, %s116
      %p130 = scmp.eq.s32.totalorder %s19, 1
      %p131 = por %p129, %p130
      %p133 = scmp.ne.s32.totalorder %s116, %s132
      %p134 = scmp.eq.s32.totalorder %s19, 0
      %p135 = por %p133, %p134
      %p136 = scmp.le.s32.totalorder 1, %s13
      %p137 = scmp.lt.s32.totalorder %s13, 3
      %p138 = pnand %p136, %p137
      %p139 = pneg %p138
      // Predicated region
      $region9: #{tpu_custom_call.1} parent=5 // pred_check
        _
      $region10: #{tpu_custom_call.1} parent=5 // pred_check_branch
        %141 = sbr.rel (%p138) target = $region12
      $region11: #{tpu_custom_call.1} parent=5 // pred_region
        %s142 = ssub.s32 %s13, 1
        // Predicated region
        $region13: #{tpu_custom_call.1} parent=11 // pred_check
          %p143 = pneg %p60
        $region14: #{tpu_custom_call.1} parent=11 // pred_check_branch
          %145 = sbr.rel (%p143) target = $region16
        $region15: #{tpu_custom_call.1} parent=11 // pred_region
          _
        $region16: #{tpu_custom_call.1} parent=11 // pred_fallthru
          _
        // Predicated region
        $region17: #{tpu_custom_call.1} parent=11 // pred_check
          %p146 = pneg %p81
        $region18: #{tpu_custom_call.1} parent=11 // pred_check_branch
          %148 = sbr.rel (%p146) target = $region20
        $region19: #{tpu_custom_call.1} parent=11 // pred_region
          _
        $region20: #{tpu_custom_call.1} parent=11 // pred_fallthru
          _
        // Predicated region
        $region21: #{tpu_custom_call.1} parent=11 // pred_check
          %p149 = pneg %p102
        $region22: #{tpu_custom_call.1} parent=11 // pred_check_branch
          %151 = sbr.rel (%p149) target = $region24
        $region23: #{tpu_custom_call.1} parent=11 // pred_region
          _
        $region24: #{tpu_custom_call.1} parent=11 // pred_fallthru
          _
      $region12: #{tpu_custom_call.1} parent=5 // pred_fallthru
        _
      %p152 = scmp.lt.s32.totalorder %s13, 2
      // Predicated region
      $region25: #{tpu_custom_call.1} parent=5 // pred_check
        %p153 = pneg %p152
      $region26: #{tpu_custom_call.1} parent=5 // pred_check_branch
        %155 = sbr.rel (%p153) target = $region28
      $region27: #{tpu_custom_call.1} parent=5 // pred_region
        // Predicated region
        $region29: #{tpu_custom_call.1} parent=27 // pred_check
          %p156 = pneg %p33
        $region30: #{tpu_custom_call.1} parent=27 // pred_check_branch
          %158 = sbr.rel (%p156) target = $region32
        $region31: #{tpu_custom_call.1} parent=27 // pred_region
          %p159 = scmp.lt.s32.totalorder %s13, 1
          %s160 = scalar_select %p159, %s13, 1
          %s161 = smul.addr %s160, 8
          %s162 = scalar_lea.vmem %s0, %s161
        $region32: #{tpu_custom_call.1} parent=27 // pred_fallthru
          _
      $region28: #{tpu_custom_call.1} parent=5 // pred_fallthru
        _
      %p163 = scmp.le.s32.totalorder 1, %s13
      %p164 = scmp.lt.s32.totalorder %s13, 3
      %p165 = pnand %p163, %p164
      %p166 = pneg %p165
      // Predicated region
      $region33: #{tpu_custom_call.1} parent=5 // pred_check
        _
      $region34: #{tpu_custom_call.1} parent=5 // pred_check_branch
        %168 = sbr.rel (%p165) target = $region36
      $region35: #{tpu_custom_call.1} parent=5 // pred_region
        %s169 = ssub.s32 %s13, 1
        %p170 = scmp.lt.s32.totalorder %s18, 1
        %s171 = scalar_select %p170, %s18, 1
        %s172 = smul.addr %s171, 8
        %s173 = scalar_lea.vmem %s0, %s172
        %p174 = pneg %p39
        %p175 = pneg %p36
        %p176 = pneg %p60
        %p177 = pneg %p57
        %p178 = pneg %p81
        %p179 = pneg %p78
        %p180 = pneg %p102
        %p181 = pneg %p99
        %p182 = pneg %p128
        %p183 = pneg %p125
        %s184 = sand.u32 %s115, 1
        %s185 = scalar_lea.sflag [#allocation3], %s184
        %s186 = sand.u32 %s115, 1
        %s187 = smul.addr %s186, 8
        %s188 = scalar_lea.vmem [#allocation2], %s187
        %p189 = scmp.lt.s32.totalorder %s18, 1
        %s190 = scalar_select %p189, %s18, 1
        %s191 = smul.addr %s190, 8
        %s192 = scalar_lea.vmem %s0, %s191
        %v193 = vld [vmem:[%s192] sm:$0xff]
        %v194 = vld [vmem:[%s1] sm:$0xff]
        %v195 = vld [vmem:[%s1 + $0x8] sm:$0xff]
        %v196 = vld [vmem:[%s1 + $0x10] sm:$0xff]
        %v197 = vld [vmem:[%s1 + $0x18] sm:$0xff]
        %v198 = vld [vmem:[%s2] sm:$0xff]
        %v199 = vld [vmem:[%s2 + $0x8] sm:$0xff]
        %v200 = vld [vmem:[%s2 + $0x10] sm:$0xff]
        %v201 = vld [vmem:[%s2 + $0x18] sm:$0xff]
        %v202 = vld [vmem:[%s2 + $0x20] sm:$0xff]
        %v203 = vld [vmem:[%s2 + $0x28] sm:$0xff]
        %v204 = vld [vmem:[%s2 + $0x30] sm:$0xff]
        %v205 = vld [vmem:[%s2 + $0x38] sm:$0xff]
        %v206 = vld [vmem:[%s3] sm:$0x1]
        %vm207 = vcmask 261120
        %v209 = vsel %vm207, %v193, 0
        %211 = vmatpush.msra.mxu0 0.0
        %212 = vmatpush.msra.mxu0 0.0
        %213 = vmatpush.msra.mxu0 0.0
        %214 = vmatpush.msra.mxu0 0.0
        %215 = vmatpush.msra.mxu0 0.0
        %216 = vmatpush.msra.mxu0 0.0
        %217 = vmatpush.msra.mxu0 0.0
        %218 = vmatpush.msra.mxu0 0.0
        %219 = vmatpush.msra.mxu0 0.0
        %220 = vmatpush.msra.mxu0 0.0
        %221 = vmatpush.msra.mxu0 0.0
        %222 = vmatpush.msra.mxu0 0.0
        %223 = vmatpush.msra.mxu0 %v197
        %224 = vmatpush.msra.mxu0 %v196
        %225 = vmatpush.msra.mxu0 %v195
        %226 = vmatpush.msra.mxu0 %v194
        %227 = vmatmul.f32.gmra.mxu0 %v209
        %v228 = vpop.f32.mrf.mxu0
        %v229 = vadd.f32 0.0, %v228
        %230 = vdwg.mxu0
        %vm231 = vcmask 523264
        %v232 = vsel %vm231, %v229, -inf
        %233 = vmax.xlane.f32.xlu0 %v232
        %v234 = vpop.xlane.xlu0 %233
        %v235 = vlaneseq
        %v236 = vand.u32 %v235, 127
        %vm237 = vcmp.eq.f32.partialorder %v229, %v234
        %v238 = vsel %vm237, %v236, 64
        %v239 = vsel %vm231, %v238, 2147483647
        %v240 = vand.u32 %v239, 65535
        %v241 = vshra.s32 %v239, 16
        %v242 = vcvt.s32.f32 %v240
        %v243 = vcvt.s32.f32 %v241
        %244 = vmin.xlane.f32.xlu0 %v243
        %v245 = vpop.xlane.xlu0 %244
        %vm246 = vcmp.eq.f32.partialorder %v243, %v245
        %v247 = vsel %vm246, %v242, inf
        %248 = vmin.xlane.f32.xlu0 %v247
        %v249 = vpop.xlane.xlu0 %248
        %v250 = vcvt.f32.s32 %v249
        %v251 = vcvt.f32.s32 %v245
        %v252 = vshll.u32 %v251, 16
        %v253 = vadd.s32 %v252, %v250
        %vm254 = vcmp.eq.s32.totalorder %v236, %v253
        %v255 = vsel %vm254, 1, 0
        %v256 = vcvt.s32.f32 %v255
        %v258 = vsel %vm231, %v256, 0
        %260 = vmatpush.msra.mxu0 0.0
        %261 = vmatpush.msra.mxu0 0.0
        %262 = vmatpush.msra.mxu0 0.0
        %263 = vmatpush.msra.mxu0 0.0
        %264 = vmatpush.msra.mxu0 0.0
        %265 = vmatpush.msra.mxu0 0.0
        %266 = vmatpush.msra.mxu0 0.0
        %267 = vmatpush.msra.mxu0 0.0
        %268 = vmatpush.msra.mxu0 %v205
        %269 = vmatpush.msra.mxu0 %v204
        %270 = vmatpush.msra.mxu0 %v203
        %271 = vmatpush.msra.mxu0 %v202
        %272 = vmatpush.msra.mxu0 %v201
        %273 = vmatpush.msra.mxu0 %v200
        %274 = vmatpush.msra.mxu0 %v199
        %275 = vmatpush.msra.mxu0 %v198
        %276 = vmatmul.f32.gmra.mxu0 %v258
        %v277 = vpop.f32.mrf.mxu0
        %v278 = vadd.f32 0.0, %v277
        %279 = vdwg.mxu0
        %v280 = vmul.f32 %v193, %v278
        %v281 = vsel %vm207, %v280, 0.0
        %282 = vadd.xlane.f32.xlu0 %v281
        %v283 = vpop.xlane.xlu0 %282
        %v284 = vmax.f32 %v283, 1e-05
        %v285 = vlog2.pop %v284
        %v286 = vmul.f32 %v285, 0.6931472
        %v287 = vmul.f32 %v286, 2.0
        %v289 = vperm.slane %v206, 0
        %v291 = vsub.f32 %v287, %v289
        %v292 = vmul.f32 %v289, %v291
        %vm293 = vcmask 130048
        %v294 = vsel %vm293, %v292, -inf
        %295 = vmax.xlane.f32.xlu0 %v294
        %v296 = vpop.xlane.xlu0 %295
        %vm297 = vcmp.eq.f32.partialorder %v292, %v296
        %v298 = vsel %vm297, %v236, 16
        %v299 = vsel %vm293, %v298, 2147483647
        %v300 = vand.u32 %v299, 65535
        %v301 = vshra.s32 %v299, 16
        %v302 = vcvt.s32.f32 %v300
        %v303 = vcvt.s32.f32 %v301
        %304 = vmin.xlane.f32.xlu0 %v303
        %v305 = vpop.xlane.xlu0 %304
        %vm306 = vcmp.eq.f32.partialorder %v303, %v305
        %v307 = vsel %vm306, %v302, inf
        %308 = vmin.xlane.f32.xlu0 %v307
        %v309 = vpop.xlane.xlu0 %308
        %v310 = vcvt.f32.s32 %v309
        %v311 = vcvt.f32.s32 %v305
        %v312 = vshll.u32 %v311, 16
        %v313 = vadd.s32 %v312, %v310
        %vm314 = vcmp.eq.s32.totalorder %v236, %v313
        %v315 = vsel %vm314, 1, 0
        %v316 = vcvt.s32.f32 %v315
        %v317 = vmul.f32 %v316, %v289
        %v318 = vsel %vm293, %v317, 0.0
        %319 = vadd.xlane.f32.xlu0 %v318
        %v320 = vpop.xlane.xlu0 %319
        %v321 = vmul.f32 %v320, 1.442695
        %v322 = vpow.pop %v321
        %v323 = vmul.f32 %v322, %v278
        %324 = vst.msk [vmem:[%s188] sm:$0xff] %vm207, %v323
        %s325 = sand.u32 %s115, 1
        %s326 = scalar_lea.sflag [#allocation3], %s325
        %s327 = sand.u32 %s115, 1
        %s328 = smul.addr %s327, 8
        %s329 = scalar_lea.vmem [#allocation2], %s328
        // Predicated region
        $region37: #{tpu_custom_call.1} parent=35 // pred_check
          %p330 = pneg %p125
        $region38: #{tpu_custom_call.1} parent=35 // pred_check_branch
          %332 = sbr.rel (%p330) target = $region40
        $region39: #{tpu_custom_call.1} parent=35 // pred_region
          %334 = vsyncadd %s326, 0
          %s335 = smul.addr %s18, 8
          %s336 = scalar_lea.hbm %s4, %s335
          %s338 = sshll.u32 %s329, 4
          %s339 = int_to_ptr.vmem [resolvable:$true] %s338
          %s340 = sshll.u32 %s336, 4
          %s341 = int_to_ptr.hbm [resolvable:$true] %s340
          %343 = dma.vmem_to_hbm [thread:$0]  %s339, 128, %s341, %s326
        $region40: #{tpu_custom_call.1} parent=35 // pred_fallthru
          _
      $region36: #{tpu_custom_call.1} parent=5 // pred_fallthru
        _
      %p344 = scmp.le.s32.totalorder 2, %s13
      // Predicated region
      $region41: #{tpu_custom_call.1} parent=5 // pred_check
        %p345 = pneg %p344
      $region42: #{tpu_custom_call.1} parent=5 // pred_check_branch
        %347 = sbr.rel (%p345) target = $region44
      $region43: #{tpu_custom_call.1} parent=5 // pred_region
        %s348 = ssub.s32 %s13, 2
        // Predicated region
        $region45: #{tpu_custom_call.1} parent=43 // pred_check
          %p349 = pneg %p131
        $region46: #{tpu_custom_call.1} parent=43 // pred_check_branch
          %351 = sbr.rel (%p349) target = $region48
        $region47: #{tpu_custom_call.1} parent=43 // pred_region
          %s352 = sand.u32 %s116, 1
          %s353 = scalar_lea.sflag [#allocation3], %s352
          %s354 = sand.u32 %s116, 1
          %s355 = smul.addr %s354, 8
          %s356 = scalar_lea.vmem [#allocation2], %s355
          %358 = dma.done %s353, 128
        $region48: #{tpu_custom_call.1} parent=43 // pred_fallthru
          _
      $region44: #{tpu_custom_call.1} parent=5 // pred_fallthru
        _
    $region6: #{tpu_custom_call.1} parent=1 // loop_footer
      %s17 = sadd.s32 1, %s13
    $region7: #{tpu_custom_call.1} parent=1 // loop_footer_branch
      %12 = sbr.rel target = $region3
    $region8: #{tpu_custom_call.1} parent=1 // loop_exit
      _
    %359 = vsyncpa [#allocation3], 1
    %s360 = scalar_lea.sflag [#allocation3], 1
    %361 = vsyncpa %s360, 1

</llo_original>
